<compile_context>
chip_gen: v7x
topology: tpu7x:2x2x1
jax: 0.10.0
libtpu: 0.0.40
codegen_flags: <defaults>
</compile_context>

<pallas_src>
import math

import jax
import jax.numpy as jnp
from jax.experimental import pallas as pl
from jax.experimental.pallas import tpu as pltpu


def _round_up(x, m):
    return (x + m - 1) // m * m


def _vmem_budget_bytes():
    """Physical VMEM with ~15% headroom; conservative 64 MiB fallback (v7x-safe)."""
    cap = 64 * 1024 * 1024
    try:
        info = pltpu.get_tpu_info()
        cap = int(getattr(info, "vmem_capacity_bytes", cap) or cap)
    except Exception:
        pass
    return int(0.85 * cap)


def _resident_spec(block_shape, single_buffer):
    """BlockSpec for an operand with a constant index_map (never re-fetched)."""
    index_map = lambda i: (0,) * len(block_shape)
    if single_buffer:
        try:
            # Single-buffer the resident operand: frees the double-buffer copy's VMEM.
            return pl.BlockSpec(block_shape, index_map, pipeline_mode=pl.Buffered(1))
        except Exception:
            pass
    return pl.BlockSpec(block_shape, index_map)


# ---------------------------------------------------------------------------
# Pass 1: embedding matmul + per-tile batch statistics.
# ---------------------------------------------------------------------------
def _embed_stats_kernel(x_ref, w1_ref, h_ref, sum_ref, ssq_ref):
    # MXU matmul, bf16 inputs / f32 accumulation. (b1 intentionally omitted — cancelled
    # by the batch-stat mean subtraction that follows.)
    h = jnp.dot(x_ref[...], w1_ref[...], preferred_element_type=jnp.float32)
    h_ref[...] = h.astype(h_ref.dtype)
    # Per-tile partial statistics (f32), each tile owns its own output row.
    sum_ref[...] = jnp.sum(h, axis=0, keepdims=True)[None]
    ssq_ref[...] = jnp.sum(h * h, axis=0, keepdims=True)[None]


# ---------------------------------------------------------------------------
# Pass 2: classifier matmul with BN folded into (W2_eff, bias_eff).
# ---------------------------------------------------------------------------
def _classifier_kernel(h_ref, w2_ref, bias_ref, out_ref):
    y = jnp.dot(h_ref[...], w2_ref[...], preferred_element_type=jnp.float32) + bias_ref[...]
    out_ref[...] = y.astype(out_ref.dtype)


def _forward_impl(x, w1, gamma, beta, w2, b2, *, tile_b, eps, single_buffer_residents):
    B, input_dim = x.shape
    nb = w1.shape[1]
    class_num = w2.shape[1]
    f32, bf16 = jnp.float32, jnp.bfloat16

    # Lane-dense padding of K / bottleneck / class dims.
    k_p = _round_up(input_dim, 128)
    nb_p = _round_up(nb, 128)
    cls_p = _round_up(class_num, 128)

    # Batch tile: multiple of 16 (bf16 sublane packing); default 512 is a multiple of
    # 256 for full MXU occupancy on v6e/v7x. Clamp to (rounded) batch size.
    tile_b = _round_up(max(16, min(tile_b, _round_up(B, 16))), 16)
    budget = _vmem_budget_bytes()

    def pass_bytes(tb):
        # Worst-case per-step VMEM for each pass (double-buffered streamed operands,
        # resident weights counted twice in case single-buffering is unavailable,
        # plus f32 compute temporaries). Kernel VMEM is independent of B.
        p1 = (2 * tb * k_p * 2          # x tiles
              + 2 * k_p * nb_p * 2      # W1
              + 2 * tb * nb_p * 2       # h output tiles
              + 4 * nb_p * 4            # partial sum / ssq output tiles
              + 2 * tb * nb_p * 4)      # f32 temporaries
        p2 = (2 * tb * nb_p * 2         # h tiles
              + 2 * nb_p * cls_p * 2    # W2_eff
              + 2 * cls_p * 4           # bias_eff
              + 2 * tb * cls_p * 4      # output tiles
              + tb * cls_p * 4)         # f32 temporary
        return max(p1, p2)

    while tile_b > 16 and pass_bytes(tile_b) > budget:
        tile_b = max(16, _round_up(tile_b // 2, 16))

    b_p = _round_up(B, tile_b)
    n_tiles = b_p // tile_b
    vmem_limit = int(min(max(2 * pass_bytes(tile_b), 16 * 1024 * 1024), budget))

    # Padded operands. Zero batch-padding rows are harmless: their h rows are exactly
    # zero (b1 dropped), and the statistics are divided by the true batch size B.
    x_p = jnp.pad(x.astype(bf16), ((0, b_p - B), (0, k_p - input_dim)))
    w1_p = jnp.pad(w1.astype(bf16), ((0, k_p - input_dim), (0, nb_p - nb)))
    w2_p = jnp.pad(w2.astype(f32), ((0, nb_p - nb), (0, cls_p - class_num)))
    gamma_p = jnp.pad(gamma.reshape(-1).astype(f32), (0, nb_p - nb))
    beta_p = jnp.pad(beta.reshape(-1).astype(f32), (0, nb_p - nb))
    b2_p = jnp.pad(b2.reshape(-1).astype(f32), (0, cls_p - class_num))

    # -------- Pass 1: embedding + per-tile statistics (batch axis parallel). --------
    h_hbm, psum, pssq = pl.pallas_call(
        _embed_stats_kernel,
        out_shape=(
            jax.ShapeDtypeStruct((b_p, nb_p), bf16),          # h staged in HBM (bf16)
            jax.ShapeDtypeStruct((n_tiles, 1, nb_p), f32),    # per-tile sum
            jax.ShapeDtypeStruct((n_tiles, 1, nb_p), f32),    # per-tile sum of squares
        ),
        grid_spec=pltpu.PrefetchScalarGridSpec(
            num_scalar_prefetch=0,
            grid=(n_tiles,),
            in_specs=[
                pl.BlockSpec((tile_b, k_p), lambda i: (i, 0)),            # x: streamed
                _resident_spec((k_p, nb_p), single_buffer_residents),     # W1: resident
            ],
            out_specs=[
                pl.BlockSpec((tile_b, nb_p), lambda i: (i, 0)),
                pl.BlockSpec((1, 1, nb_p), lambda i: (i, 0, 0)),
                pl.BlockSpec((1, 1, nb_p), lambda i: (i, 0, 0)),
            ],
        ),
        compiler_params=pltpu.CompilerParams(
            dimension_semantics=("parallel",),
            vmem_limit_bytes=vmem_limit,
        ),
    )(x_p, w1_p)

    # -------- Glue (tiny, plain JAX, all f32): reduce partials, fold BN. --------
    total = jnp.sum(psum, axis=(0, 1))                     # (nb_p,)
    total_sq = jnp.sum(pssq, axis=(0, 1))
    mean = total / B
    var = jnp.maximum(total_sq / B - mean * mean, 0.0)     # biased (training) variance
    s = gamma_p * jax.lax.rsqrt(var + eps)                 # multiplicative BN factor
    w2_eff = (s[:, None] * w2_p).astype(bf16)              # scale W2 rows once (nb_p x cls_p)
    bias_eff = ((beta_p - mean * s)[None, :] @ w2_p + b2_p[None, :]).astype(f32)  # (1, cls_p)

    # -------- Pass 2: pipelined, batch-tiled classifier matmul. --------
    out = pl.pallas_call(
        _classifier_kernel,
        out_shape=jax.ShapeDtypeStruct((b_p, cls_p), f32),
        grid_spec=pltpu.PrefetchScalarGridSpec(
            num_scalar_prefetch=0,
            grid=(n_tiles,),
            in_specs=[
                pl.BlockSpec((tile_b, nb_p), lambda i: (i, 0)),           # h: streamed
                _resident_spec((nb_p, cls_p), single_buffer_residents),   # W2_eff: resident
                _resident_spec((1, cls_p), single_buffer_residents),      # bias_eff: resident
            ],
            out_specs=pl.BlockSpec((tile_b, cls_p), lambda i: (i, 0)),
        ),
        compiler_params=pltpu.CompilerParams(
            dimension_semantics=("parallel",),
            vmem_limit_bytes=vmem_limit,
        ),
    )(h_hbm, w2_eff, bias_eff)

    return out[:B, :class_num]


def class_block_forward(x, w1, b1, gamma, beta, w2, b2, *, tile_b=512, eps=1e-5):
    """ClassBlock forward (default flags: linear=True, bnorm=True, relu=False, drop=0).

    b1 is accepted for API parity but is a mathematical no-op under batch-statistics
    BatchNorm, so it is not sent to the kernel.
    """
    del b1
    try:
        return _forward_impl(x, w1, gamma, beta, w2, b2, tile_b=tile_b, eps=eps,
                             single_buffer_residents=True)
    except Exception:
        # pl.Buffered(1) not supported by this jax/Mosaic build -> retry double-buffered.
        return _forward_impl(x, w1, gamma, beta, w2, b2, tile_b=tile_b, eps=eps,
                             single_buffer_residents=False)


def init_params(key, input_dim, num_bottleneck, class_num):
    k1, k2, k3 = jax.random.split(key, 3)

    # Embedding Linear: kaiming_normal_(a=0, mode='fan_out') on (out, in) weight
    # => fan = num_bottleneck, gain = sqrt(2); bias = 0.
    std1 = math.sqrt(2.0 / num_bottleneck)
    w1 = std1 * jax.random.normal(k1, (input_dim, num_bottleneck), jnp.float32)  # pre-transposed
    b1 = jnp.zeros((1, num_bottleneck), jnp.float32)

    # BatchNorm1d: weight ~ N(1, 0.02), bias = 0.
    gamma = 1.0 + 0.02 * jax.random.normal(k2, (1, num_bottleneck), jnp.float32)
    beta = jnp.zeros((1, num_bottleneck), jnp.float32)

    # Classifier Linear: weight ~ N(0, 0.001), bias = 0.
    w2 = 0.001 * jax.random.normal(k3, (num_bottleneck, class_num), jnp.float32)  # pre-transposed
    b2 = jnp.zeros((1, class_num), jnp.float32)

    return w1, b1, gamma, beta, w2, b2


if __name__ == "__main__":
    key = jax.random.PRNGKey(0)
    kx, kp = jax.random.split(key)

    # Small shapes; B=40 with tile_b=16 exercises multi-tile partial-stats reduction,
    # lane padding (32 -> 128, 64 -> 128, 16 -> 128) and batch padding (40 -> 48).
    B, input_dim, num_bottleneck, class_num = 40, 32, 64, 16
    x = jax.random.normal(kx, (B, input_dim), jnp.float32)
    params = init_params(kp, input_dim, num_bottleneck, class_num)

    out = class_block_forward(x, *params, tile_b=16)
    jax.block_until_ready(out)
    assert out.shape == (B, class_num)

    # Plain-JAX f32 reference (training-mode BatchNorm: batch mean, biased var, eps=1e-5).
    w1, b1, gamma, beta, w2, b2 = params
    h = x @ w1 + b1
    mu = h.mean(0, keepdims=True)
    var = ((h - mu) ** 2).mean(0, keepdims=True)
    hn = (h - mu) / jnp.sqrt(var + 1e-5) * gamma + beta
    ref = hn @ w2 + b2

    # bf16 MXU inputs => looser tolerance than the pure-f32 reference.
    assert jnp.allclose(out, ref, atol=2e-3, rtol=5e-2), float(jnp.max(jnp.abs(out - ref)))

    print("KERNEL_OK")
</pallas_src>

<mosaic_0001>
module attributes {stable_mosaic.version = 11 : i64} {
  func.func @_embed_stats_kernel(%arg0: i32, %arg1: memref<16x128xbf16, #tpu.memory_space<vmem>>, %arg2: memref<128x128xbf16, #tpu.memory_space<vmem>>, %arg3: memref<16x128xbf16, #tpu.memory_space<vmem>>, %arg4: memref<1x1x128xf32, #tpu.memory_space<vmem>>, %arg5: memref<1x1x128xf32, #tpu.memory_space<vmem>>) attributes {dimension_semantics = [#tpu.dimension_semantics<parallel>], iteration_bounds = array<i64: 3>, scalar_prefetch = 0 : i64, scratch_operands = 0 : i64, tpu.core_type = #tpu.core_type<tc>, window_params = [{transform_indices = @transform_0, window_bounds = array<i64: 16, 128>}, {pipeline_mode = #tpu.pipeline_mode<synchronous>, transform_indices = @transform_1, window_bounds = array<i64: 128, 128>}, {transform_indices = @transform_2, window_bounds = array<i64: 16, 128>}, {transform_indices = @transform_3, window_bounds = array<i64: 1, 1, 128>}, {transform_indices = @transform_4, window_bounds = array<i64: 1, 1, 128>}]} {
    %c0 = arith.constant 0 : index
    %c0_0 = arith.constant 0 : index
    %0 = vector.load %arg1[%c0, %c0_0] : memref<16x128xbf16, #tpu.memory_space<vmem>>, vector<16x128xbf16>
    %c0_1 = arith.constant 0 : index
    %c0_2 = arith.constant 0 : index
    %1 = vector.load %arg2[%c0_1, %c0_2] : memref<128x128xbf16, #tpu.memory_space<vmem>>, vector<128x128xbf16>
    %cst = arith.constant dense<0.000000e+00> : vector<16x128xf32>
    %2 = tpu.matmul %0, %1, %cst {dimension_numbers = #tpu.dot_dimension_numbers<[1], [0], [0], [1], [0, 0, 1, 1], [], []>} : vector<16x128xbf16>, vector<128x128xbf16>, vector<16x128xf32> -> vector<16x128xf32>
    %3 = arith.truncf %2 : vector<16x128xf32> to vector<16x128xbf16>
    %c0_3 = arith.constant 0 : index
    %c0_4 = arith.constant 0 : index
    %4 = vector.load %arg3[%c0_3, %c0_4] : memref<16x128xbf16, #tpu.memory_space<vmem>>, vector<16x128xbf16>
    tpu.vector_store %arg3[%c0_3, %c0_4], %3 {strides = array<i32>} : memref<16x128xbf16, #tpu.memory_space<vmem>>, vector<16x128xbf16>,
    %cst_5 = arith.constant dense<0.000000e+00> : vector<128xf32>
    %5 = vector.multi_reduction <add>, %2, %cst_5 [0] : vector<16x128xf32> to vector<128xf32>
    %6 = vector.shape_cast %5 : vector<128xf32> to vector<1x128xf32>
    %7 = vector.shape_cast %6 : vector<1x128xf32> to vector<1x1x128xf32>
    %c0_6 = arith.constant 0 : index
    %c0_7 = arith.constant 0 : index
    %c0_8 = arith.constant 0 : index
    %8 = vector.load %arg4[%c0_6, %c0_7, %c0_8] : memref<1x1x128xf32, #tpu.memory_space<vmem>>, vector<1x1x128xf32>
    tpu.vector_store %arg4[%c0_6, %c0_7, %c0_8], %7 {strides = array<i32>} : memref<1x1x128xf32, #tpu.memory_space<vmem>>, vector<1x1x128xf32>,
    %9 = arith.mulf %2, %2 : vector<16x128xf32>
    %cst_9 = arith.constant dense<0.000000e+00> : vector<128xf32>
    %10 = vector.multi_reduction <add>, %9, %cst_9 [0] : vector<16x128xf32> to vector<128xf32>
    %11 = vector.shape_cast %10 : vector<128xf32> to vector<1x128xf32>
    %12 = vector.shape_cast %11 : vector<1x128xf32> to vector<1x1x128xf32>
    %c0_10 = arith.constant 0 : index
    %c0_11 = arith.constant 0 : index
    %c0_12 = arith.constant 0 : index
    %13 = vector.load %arg5[%c0_10, %c0_11, %c0_12] : memref<1x1x128xf32, #tpu.memory_space<vmem>>, vector<1x1x128xf32>
    tpu.vector_store %arg5[%c0_10, %c0_11, %c0_12], %12 {strides = array<i32>} : memref<1x1x128xf32, #tpu.memory_space<vmem>>, vector<1x1x128xf32>,
    return
  }
  func.func @transform_0(%arg0: i32) -> (i32, i32) {
    %c0_i32 = arith.constant 0 : i32
    %c0_i32_0 = arith.constant 0 : i32
    return %arg0, %c0_i32 : i32, i32
  }
  func.func @transform_1(%arg0: i32) -> (i32, i32) {
    %c0_i32 = arith.constant 0 : i32
    %c0_i32_0 = arith.constant 0 : i32
    %c0_i32_1 = arith.constant 0 : i32
    return %c0_i32, %c0_i32_0 : i32, i32
  }
  func.func @transform_2(%arg0: i32) -> (i32, i32) {
    %c0_i32 = arith.constant 0 : i32
    %c0_i32_0 = arith.constant 0 : i32
    return %arg0, %c0_i32 : i32, i32
  }
  func.func @transform_3(%arg0: i32) -> (i32, i32, i32) {
    %c0_i32 = arith.constant 0 : i32
    %c0_i32_0 = arith.constant 0 : i32
    %c0_i32_1 = arith.constant 0 : i32
    return %arg0, %c0_i32, %c0_i32_0 : i32, i32, i32
  }
  func.func @transform_4(%arg0: i32) -> (i32, i32, i32) {
    %c0_i32 = arith.constant 0 : i32
    %c0_i32_0 = arith.constant 0 : i32
    %c0_i32_1 = arith.constant 0 : i32
    return %arg0, %c0_i32, %c0_i32_0 : i32, i32, i32
  }
}

module attributes {stable_mosaic.version = 11 : i64} {
  func.func @_embed_stats_kernel(%arg0: i32, %arg1: memref<16x128xbf16, #tpu.memory_space<vmem>>, %arg2: memref<128x128xbf16, #tpu.memory_space<vmem>>, %arg3: memref<16x128xbf16, #tpu.memory_space<vmem>>, %arg4: memref<1x1x128xf32, #tpu.memory_space<vmem>>, %arg5: memref<1x1x128xf32, #tpu.memory_space<vmem>>) attributes {dimension_semantics = [#tpu.dimension_semantics<parallel>], iteration_bounds = array<i64: 3>, scalar_prefetch = 0 : i64, scratch_operands = 0 : i64, tpu.core_type = #tpu.core_type<tc>, window_params = [{transform_indices = @transform_0, window_bounds = array<i64: 16, 128>}, {pipeline_mode = #tpu.pipeline_mode<synchronous>, transform_indices = @transform_1, window_bounds = array<i64: 128, 128>}, {transform_indices = @transform_2, window_bounds = array<i64: 16, 128>}, {transform_indices = @transform_3, window_bounds = array<i64: 1, 1, 128>}, {transform_indices = @transform_4, window_bounds = array<i64: 1, 1, 128>}]} {
    %c0 = arith.constant 0 : index
    %c0_0 = arith.constant 0 : index
    %0 = vector.load %arg1[%c0, %c0_0] : memref<16x128xbf16, #tpu.memory_space<vmem>>, vector<16x128xbf16>
    %c0_1 = arith.constant 0 : index
    %c0_2 = arith.constant 0 : index
    %1 = vector.load %arg2[%c0_1, %c0_2] : memref<128x128xbf16, #tpu.memory_space<vmem>>, vector<128x128xbf16>
    %cst = arith.constant dense<0.000000e+00> : vector<16x128xf32>
    %2 = tpu.matmul %0, %1, %cst {dimension_numbers = #tpu.dot_dimension_numbers<[1], [0], [0], [1], [0, 0, 1, 1], [], []>} : vector<16x128xbf16>, vector<128x128xbf16>, vector<16x128xf32> -> vector<16x128xf32>
    %3 = arith.truncf %2 : vector<16x128xf32> to vector<16x128xbf16>
    %c0_3 = arith.constant 0 : index
    %c0_4 = arith.constant 0 : index
    %4 = vector.load %arg3[%c0_3, %c0_4] : memref<16x128xbf16, #tpu.memory_space<vmem>>, vector<16x128xbf16>
    tpu.vector_store %arg3[%c0_3, %c0_4], %3 {strides = array<i32>} : memref<16x128xbf16, #tpu.memory_space<vmem>>, vector<16x128xbf16>,
    %cst_5 = arith.constant dense<0.000000e+00> : vector<128xf32>
    %5 = vector.multi_reduction <add>, %2, %cst_5 [0] : vector<16x128xf32> to vector<128xf32>
    %6 = vector.shape_cast %5 : vector<128xf32> to vector<1x128xf32>
    %7 = vector.shape_cast %6 : vector<1x128xf32> to vector<1x1x128xf32>
    %c0_6 = arith.constant 0 : index
    %c0_7 = arith.constant 0 : index
    %c0_8 = arith.constant 0 : index
    %8 = vector.load %arg4[%c0_6, %c0_7, %c0_8] : memref<1x1x128xf32, #tpu.memory_space<vmem>>, vector<1x1x128xf32>
    tpu.vector_store %arg4[%c0_6, %c0_7, %c0_8], %7 {strides = array<i32>} : memref<1x1x128xf32, #tpu.memory_space<vmem>>, vector<1x1x128xf32>,
    %9 = arith.mulf %2, %2 : vector<16x128xf32>
    %cst_9 = arith.constant dense<0.000000e+00> : vector<128xf32>
    %10 = vector.multi_reduction <add>, %9, %cst_9 [0] : vector<16x128xf32> to vector<128xf32>
    %11 = vector.shape_cast %10 : vector<128xf32> to vector<1x128xf32>
    %12 = vector.shape_cast %11 : vector<1x128xf32> to vector<1x1x128xf32>
    %c0_10 = arith.constant 0 : index
    %c0_11 = arith.constant 0 : index
    %c0_12 = arith.constant 0 : index
    %13 = vector.load %arg5[%c0_10, %c0_11, %c0_12] : memref<1x1x128xf32, #tpu.memory_space<vmem>>, vector<1x1x128xf32>
    tpu.vector_store %arg5[%c0_10, %c0_11, %c0_12], %12 {strides = array<i32>} : memref<1x1x128xf32, #tpu.memory_space<vmem>>, vector<1x1x128xf32>,
    return
  }
  func.func @transform_0(%arg0: i32) -> (i32, i32) {
    %c0_i32 = arith.constant 0 : i32
    %c0_i32_0 = arith.constant 0 : i32
    return %arg0, %c0_i32 : i32, i32
  }
  func.func @transform_1(%arg0: i32) -> (i32, i32) {
    %c0_i32 = arith.constant 0 : i32
    %c0_i32_0 = arith.constant 0 : i32
    %c0_i32_1 = arith.constant 0 : i32
    return %c0_i32, %c0_i32_0 : i32, i32
  }
  func.func @transform_2(%arg0: i32) -> (i32, i32) {
    %c0_i32 = arith.constant 0 : i32
    %c0_i32_0 = arith.constant 0 : i32
    return %arg0, %c0_i32 : i32, i32
  }
  func.func @transform_3(%arg0: i32) -> (i32, i32, i32) {
    %c0_i32 = arith.constant 0 : i32
    %c0_i32_0 = arith.constant 0 : i32
    %c0_i32_1 = arith.constant 0 : i32
    return %arg0, %c0_i32, %c0_i32_0 : i32, i32, i32
  }
  func.func @transform_4(%arg0: i32) -> (i32, i32, i32) {
    %c0_i32 = arith.constant 0 : i32
    %c0_i32_0 = arith.constant 0 : i32
    %c0_i32_1 = arith.constant 0 : i32
    return %arg0, %c0_i32, %c0_i32_0 : i32, i32, i32
  }
}

</mosaic_0001>

<llo_original>
// kernel: tpu_custom_call.1
$region0: #{tpu_custom_call.1}
  #allocation0 [shape = 'u32[]', space=smem, size = 0x4, offset = 0x4, fixed_abs, tag = 'smem constant byte address 0x4 - core index']
  #allocation1 [shape = 'u32[144,128]{1,0:T(1,128)}', space=vmem, size = 0x12000, scoped, tag = 'internal scratch']
  %s0 = inlined_call_operand.hbm [shape: bf16[48,128], index: 0, kind: input, shape index: {}]
  %s1 = inlined_call_operand.hbm [shape: bf16[128,128], index: 1, kind: input, shape index: {}]
  %s2 = inlined_call_operand.hbm [shape: bf16[48,128], index: 2, kind: output, shape index: {0}]
  %s3 = inlined_call_operand.hbm [shape: f32[3,1,128], index: 3, kind: output, shape index: {1}]
  %s4 = inlined_call_operand.hbm [shape: f32[3,1,128], index: 4, kind: output, shape index: {2}]
  %5 = xla_tuple %s2, %s3, %s4
  %s6 = sld [smem:[#allocation0]]
  $region65: #{tpu_custom_call.1} parent=0
    _
  %s8 = ssub.s32 1, %s6
  %s9 = scalar_select 0, %s8, %s6
  $region1: #{tpu_custom_call.1} parent=0
    #allocation2 [shape = 'u8[8192]{0}', space=vmem, size = 0x2000, scoped, tag = 'input window, operand 0']
    #allocation3 [shape = 's32[2]{0}', space=sflag, size = 0x8, scoped, tag = 'scoped memory for tpu_custom_call.1']
    #allocation4 [shape = 's32[2]{0}', space=sflag, size = 0x8, scoped, tag = 'scoped memory for tpu_custom_call.1']
    #allocation5 [shape = 'u8[32768]{0}', space=vmem, size = 0x8000, scoped, tag = 'input window, operand 1, single buffered']
    #allocation6 [shape = 's32[1]{0}', space=sflag, size = 0x4, scoped, tag = 'scoped memory for tpu_custom_call.1']
    #allocation7 [shape = 'u8[8192]{0}', space=vmem, size = 0x2000, scoped, tag = 'output window, operand 0']
    #allocation8 [shape = 'u8[1024]{0}', space=vmem, size = 0x400, scoped, tag = 'output window, operand 1']
    #allocation9 [shape = 's32[2]{0}', space=sflag, size = 0x8, scoped, tag = 'scoped memory for tpu_custom_call.1']
    #allocation10 [shape = 'u8[1024]{0}', space=vmem, size = 0x400, scoped, tag = 'output window, operand 2']
    %10 = vsyncpa [#allocation3], 0
    %s11 = scalar_lea.sflag [#allocation3], 1
    %12 = vsyncpa %s11, 0
    %13 = vsyncpa [#allocation6], 0
    %14 = vsyncpa [#allocation4], 0
    %s15 = scalar_lea.sflag [#allocation4], 1
    %16 = vsyncpa %s15, 0
    %17 = vsyncpa [#allocation9], 0
    %s18 = scalar_lea.sflag [#allocation9], 1
    %19 = vsyncpa %s18, 0
    loop: start=0, step=1, limit=5
    $region2: #{tpu_custom_call.1} parent=1 // loop_pre_header
      _
    $region3: #{tpu_custom_call.1} parent=1 // loop_header
      %s21 = sphi 0, %s25
      %p22 = scmp.ge.s32.totalorder %s21, 5
      %s31 = sphi 0, %s33
      %s34 = sphi 0, %s31
      %s35 = sphi 0, %s34
      %s51 = sphi 0, %s35
      %s55 = sphi 0, %s55
      %s57 = sphi 0, %s55
      %s58 = sphi 0, %s57
      %s72 = sphi 0, %s58
      %s78 = sphi 0, %s80
      %s81 = sphi 0, %s78
      %s82 = sphi 0, %s81
      %s98 = sphi 0, %s82
      %s104 = sphi 0, %s106
      %s107 = sphi 0, %s104
      %s108 = sphi 0, %s107
      %s124 = sphi 0, %s108
      %s130 = sphi 0, %s132
      %s133 = sphi 0, %s130
      %s134 = sphi 0, %s133
      %s150 = sphi 0, %s134
    $region4: #{tpu_custom_call.1} parent=1 // loop_header_branch
      %24 = sbr.rel (%p22) target = $region8
    $region5: #{tpu_custom_call.1} parent=1 // loop_body
      %s26 = ssub.s32 %s21, 1
      %s27 = ssub.s32 %s21, 2
      %s28 = sadd.s32 %s21, 1
      %s29 = ssub.s32 %s21, %s28
      %p30 = scmp.eq.s32.totalorder %s29, 0
      %s32 = sadd.s32 %s31, 1
      %s33 = scalar_select %p30, %s31, %s32
      %p36 = pneg %p30
      %p37 = scmp.eq.s32.totalorder %s21, 2
      %p38 = por %p36, %p37
      %p39 = scmp.ne.s32.totalorder %s31, %s34
      %p40 = scmp.eq.s32.totalorder %s21, 0
      %p41 = por %p39, %p40
      %p42 = scmp.ne.s32.totalorder %s31, %s34
      %p43 = scmp.eq.s32.totalorder %s26, 2
      %p44 = por %p42, %p43
      %p45 = scmp.ne.s32.totalorder %s34, %s35
      %p46 = scmp.eq.s32.totalorder %s26, 0
      %p47 = por %p45, %p46
      %p48 = scmp.ne.s32.totalorder %s34, %s35
      %p49 = scmp.eq.s32.totalorder %s27, 2
      %p50 = por %p48, %p49
      %p52 = scmp.ne.s32.totalorder %s35, %s51
      %p53 = scmp.eq.s32.totalorder %s27, 0
      %p54 = por %p52, %p53
      %s56 = sadd.s32 %s55, 1
      %p59 = scmp.eq.s32.totalorder %s21, 2
      %p60 = scmp.ne.s32.totalorder %s55, %s57
      %p61 = scmp.eq.s32.totalorder %s21, 0
      %p62 = por %p60, %p61
      %p63 = scmp.ne.s32.totalorder %s55, %s57
      %p64 = scmp.eq.s32.totalorder %s26, 2
      %p65 = por %p63, %p64
      %p66 = scmp.ne.s32.totalorder %s57, %s58
      %p67 = scmp.eq.s32.totalorder %s26, 0
      %p68 = por %p66, %p67
      %p69 = scmp.ne.s32.totalorder %s57, %s58
      %p70 = scmp.eq.s32.totalorder %s27, 2
      %p71 = por %p69, %p70
      %p73 = scmp.ne.s32.totalorder %s58, %s72
      %p74 = scmp.eq.s32.totalorder %s27, 0
      %p75 = por %p73, %p74
      %s76 = ssub.s32 %s21, %s28
      %p77 = scmp.eq.s32.totalorder %s76, 0
      %s79 = sadd.s32 %s78, 1
      %s80 = scalar_select %p77, %s78, %s79
      %p83 = pneg %p77
      %p84 = scmp.eq.s32.totalorder %s21, 2
      %p85 = por %p83, %p84
      %p86 = scmp.ne.s32.totalorder %s78, %s81
      %p87 = scmp.eq.s32.totalorder %s21, 0
      %p88 = por %p86, %p87
      %p89 = scmp.ne.s32.totalorder %s78, %s81
      %p90 = scmp.eq.s32.totalorder %s26, 2
      %p91 = por %p89, %p90
      %p92 = scmp.ne.s32.totalorder %s81, %s82
      %p93 = scmp.eq.s32.totalorder %s26, 0
      %p94 = por %p92, %p93
      %p95 = scmp.ne.s32.totalorder %s81, %s82
      %p96 = scmp.eq.s32.totalorder %s27, 2
      %p97 = por %p95, %p96
      %p99 = scmp.ne.s32.totalorder %s82, %s98
      %p100 = scmp.eq.s32.totalorder %s27, 0
      %p101 = por %p99, %p100
      %s102 = ssub.s32 %s21, %s28
      %p103 = scmp.eq.s32.totalorder %s102, 0
      %s105 = sadd.s32 %s104, 1
      %s106 = scalar_select %p103, %s104, %s105
      %p109 = pneg %p103
      %p110 = scmp.eq.s32.totalorder %s21, 2
      %p111 = por %p109, %p110
      %p112 = scmp.ne.s32.totalorder %s104, %s107
      %p113 = scmp.eq.s32.totalorder %s21, 0
      %p114 = por %p112, %p113
      %p115 = scmp.ne.s32.totalorder %s104, %s107
      %p116 = scmp.eq.s32.totalorder %s26, 2
      %p117 = por %p115, %p116
      %p118 = scmp.ne.s32.totalorder %s107, %s108
      %p119 = scmp.eq.s32.totalorder %s26, 0
      %p120 = por %p118, %p119
      %p121 = scmp.ne.s32.totalorder %s107, %s108
      %p122 = scmp.eq.s32.totalorder %s27, 2
      %p123 = por %p121, %p122
      %p125 = scmp.ne.s32.totalorder %s108, %s124
      %p126 = scmp.eq.s32.totalorder %s27, 0
      %p127 = por %p125, %p126
      %s128 = ssub.s32 %s21, %s28
      %p129 = scmp.eq.s32.totalorder %s128, 0
      %s131 = sadd.s32 %s130, 1
      %s132 = scalar_select %p129, %s130, %s131
      %p135 = pneg %p129
      %p136 = scmp.eq.s32.totalorder %s21, 2
      %p137 = por %p135, %p136
      %p138 = scmp.ne.s32.totalorder %s130, %s133
      %p139 = scmp.eq.s32.totalorder %s21, 0
      %p140 = por %p138, %p139
      %p141 = scmp.ne.s32.totalorder %s130, %s133
      %p142 = scmp.eq.s32.totalorder %s26, 2
      %p143 = por %p141, %p142
      %p144 = scmp.ne.s32.totalorder %s133, %s134
      %p145 = scmp.eq.s32.totalorder %s26, 0
      %p146 = por %p144, %p145
      %p147 = scmp.ne.s32.totalorder %s133, %s134
      %p148 = scmp.eq.s32.totalorder %s27, 2
      %p149 = por %p147, %p148
      %p151 = scmp.ne.s32.totalorder %s134, %s150
      %p152 = scmp.eq.s32.totalorder %s27, 0
      %p153 = por %p151, %p152
      %p154 = scmp.le.s32.totalorder 1, %s21
      %p155 = scmp.lt.s32.totalorder %s21, 4
      %p156 = pnand %p154, %p155
      %p157 = pneg %p156
      // Predicated region
      $region9: #{tpu_custom_call.1} parent=5 // pred_check
        _
      $region10: #{tpu_custom_call.1} parent=5 // pred_check_branch
        %159 = sbr.rel (%p156) target = $region12
      $region11: #{tpu_custom_call.1} parent=5 // pred_region
        %s160 = ssub.s32 %s21, 1
        // Predicated region
        $region13: #{tpu_custom_call.1} parent=11 // pred_check
          %p161 = pneg %p68
        $region14: #{tpu_custom_call.1} parent=11 // pred_check_branch
          %163 = sbr.rel (%p161) target = $region16
        $region15: #{tpu_custom_call.1} parent=11 // pred_region
          %s165 = ssub.s32 1024, 1024
          %166 = vsyncadd [#allocation6], %s165
          %s167 = sshll.u32 [#allocation5], 4
          %s168 = int_to_ptr.vmem [resolvable:$true] %s167
          %173 = dma.hbm_to_vmem [thread:$0]  %s1, 1024, %s168, [#allocation6], 64, 64, 4
        $region16: #{tpu_custom_call.1} parent=11 // pred_fallthru
          _
      $region12: #{tpu_custom_call.1} parent=5 // pred_fallthru
        _
      %p174 = scmp.lt.s32.totalorder %s21, 3
      // Predicated region
      $region17: #{tpu_custom_call.1} parent=5 // pred_check
        %p175 = pneg %p174
      $region18: #{tpu_custom_call.1} parent=5 // pred_check_branch
        %177 = sbr.rel (%p175) target = $region20
      $region19: #{tpu_custom_call.1} parent=5 // pred_region
        // Predicated region
        $region21: #{tpu_custom_call.1} parent=19 // pred_check
          %p178 = pneg %p41
        $region22: #{tpu_custom_call.1} parent=19 // pred_check_branch
          %180 = sbr.rel (%p178) target = $region24
        $region23: #{tpu_custom_call.1} parent=19 // pred_region
          %s181 = sand.u32 %s31, 1
          %s182 = scalar_lea.sflag [#allocation3], %s181
          %s183 = sand.u32 %s31, 1
          %s184 = smul.addr %s183, 8
          %s185 = scalar_lea.vmem [#allocation2], %s184
          %s186 = smul.u32 2, %s21
          %s188 = ssub.s32 128, 128
          %189 = vsyncadd %s182, %s188
          %s190 = smul.addr %s186, 64
          %s191 = scalar_lea.hbm %s0, %s190
          %s192 = sshll.u32 %s185, 4
          %s193 = int_to_ptr.vmem [resolvable:$true] %s192
          %198 = dma.hbm_to_vmem [thread:$0]  %s191, 128, %s193, %s182, 64, 64, 4
        $region24: #{tpu_custom_call.1} parent=19 // pred_fallthru
          _
      $region20: #{tpu_custom_call.1} parent=5 // pred_fallthru
        _
      %p199 = scmp.le.s32.totalorder 1, %s21
      %p200 = scmp.lt.s32.totalorder %s21, 4
      %p201 = pnand %p199, %p200
      %p202 = pneg %p201
      // Predicated region
      $region25: #{tpu_custom_call.1} parent=5 // pred_check
        _
      $region26: #{tpu_custom_call.1} parent=5 // pred_check_branch
        %204 = sbr.rel (%p201) target = $region28
      $region27: #{tpu_custom_call.1} parent=5 // pred_region
        %s205 = ssub.s32 %s21, 1
        %s206 = sand.u32 %s34, 1
        %s207 = scalar_lea.sflag [#allocation3], %s206
        %s208 = sand.u32 %s34, 1
        %s209 = smul.addr %s208, 8
        %s210 = scalar_lea.vmem [#allocation2], %s209
        // Predicated region
        $region29: #{tpu_custom_call.1} parent=27 // pred_check
          %p211 = pneg %p47
        $region30: #{tpu_custom_call.1} parent=27 // pred_check_branch
          %213 = sbr.rel (%p211) target = $region32
        $region31: #{tpu_custom_call.1} parent=27 // pred_region
          %214 = dma.done %s207, 128
        $region32: #{tpu_custom_call.1} parent=27 // pred_fallthru
          _
        // Predicated region
        $region33: #{tpu_custom_call.1} parent=27 // pred_check
          %p215 = pneg %p68
        $region34: #{tpu_custom_call.1} parent=27 // pred_check_branch
          %217 = sbr.rel (%p215) target = $region36
        $region35: #{tpu_custom_call.1} parent=27 // pred_region
          %218 = dma.done [#allocation6], 1024
        $region36: #{tpu_custom_call.1} parent=27 // pred_fallthru
          _
        %s219 = sand.u32 %s34, 1
        %s220 = scalar_lea.sflag [#allocation3], %s219
        %s221 = sand.u32 %s34, 1
        %s222 = smul.addr %s221, 8
        %s223 = scalar_lea.vmem [#allocation2], %s222
        %p224 = pneg %p47
        %p225 = pneg %p44
        %p226 = pneg %p68
        %p227 = pneg %p65
        %p228 = pneg %p94
        %p229 = pneg %p91
        %s230 = sand.u32 %s81, 1
        %s231 = scalar_lea.sflag [#allocation4], %s230
        %s232 = sand.u32 %s81, 1
        %s233 = smul.addr %s232, 8
        %s234 = scalar_lea.vmem [#allocation7], %s233
        %p235 = pneg %p120
        %p236 = pneg %p117
        %s237 = sand.u32 %s26, 1
        %s238 = scalar_lea.sflag [#allocation9], %s237
        %s239 = sand.u32 %s107, 1
        %s240 = scalar_lea.vmem [#allocation8], %s239
        %p241 = pneg %p146
        %p242 = pneg %p143
        %s243 = sand.u32 %s26, 1
        %s244 = scalar_lea.sflag [#allocation9], %s243
        %s245 = sand.u32 %s133, 1
        %s246 = scalar_lea.vmem [#allocation10], %s245
        %s247 = smul.u32 2, %s26
        %s248 = smul.u32 2, %s26
        %v250 = vld [vmem:[%s210] sm:$0xf]
        %v251 = vld [vmem:[%s210 + $0x4] sm:$0xf]
        %v252 = vld [vmem:[#allocation5] sm:$0xf]
        %v253 = vld [vmem:[#allocation5 + $0x4] sm:$0xf]
        %v254 = vld [vmem:[#allocation5 + $0x8] sm:$0xf]
        %v255 = vld [vmem:[#allocation5 + $0xc] sm:$0xf]
        %v256 = vld [vmem:[#allocation5 + $0x10] sm:$0xf]
        %v257 = vld [vmem:[#allocation5 + $0x14] sm:$0xf]
        %v258 = vld [vmem:[#allocation5 + $0x18] sm:$0xf]
        %v259 = vld [vmem:[#allocation5 + $0x1c] sm:$0xf]
        %v260 = vld [vmem:[#allocation5 + $0x20] sm:$0xf]
        %v261 = vld [vmem:[#allocation5 + $0x24] sm:$0xf]
        %v262 = vld [vmem:[#allocation5 + $0x28] sm:$0xf]
        %v263 = vld [vmem:[#allocation5 + $0x2c] sm:$0xf]
        %v264 = vld [vmem:[#allocation5 + $0x30] sm:$0xf]
        %v265 = vld [vmem:[#allocation5 + $0x34] sm:$0xf]
        %v266 = vld [vmem:[#allocation5 + $0x38] sm:$0xf]
        %v267 = vld [vmem:[#allocation5 + $0x3c] sm:$0xf]
        %v270 = vunpack.c.l.b16 %v250
        %v271 = vunpack.c.l.b16 %v251
        %v272 = vpack.c.b16 %v271, %v270
        %v290 = vunpack.c.l.b16 %v252
        %v291 = vunpack.c.l.b16 %v253
        %v292 = vunpack.c.l.b16 %v254
        %v293 = vunpack.c.l.b16 %v255
        %v294 = vunpack.c.l.b16 %v256
        %v295 = vunpack.c.l.b16 %v257
        %v296 = vunpack.c.l.b16 %v258
        %v297 = vunpack.c.l.b16 %v259
        %v298 = vunpack.c.l.b16 %v260
        %v299 = vunpack.c.l.b16 %v261
        %v300 = vunpack.c.l.b16 %v262
        %v301 = vunpack.c.l.b16 %v263
        %v302 = vunpack.c.l.b16 %v264
        %v303 = vunpack.c.l.b16 %v265
        %v304 = vunpack.c.l.b16 %v266
        %v305 = vunpack.c.l.b16 %v267
        %v306 = vpack.c.b16 %v291, %v290
        %v307 = vpack.c.b16 %v293, %v292
        %v308 = vpack.c.b16 %v295, %v294
        %v309 = vpack.c.b16 %v297, %v296
        %v310 = vpack.c.b16 %v299, %v298
        %v311 = vpack.c.b16 %v301, %v300
        %v312 = vpack.c.b16 %v303, %v302
        %v313 = vpack.c.b16 %v305, %v304
        %322 = vmatprep.subr.bf16.mxu0 0
        %323 = vmatpush1.bf16.msra.mxu0 %v306
        %324 = vmatprep.subr.bf16.mxu0 0
        %325 = vmatpush1.bf16.msra.mxu0 %v307
        %326 = vmatprep.subr.bf16.mxu0 0
        %327 = vmatpush1.bf16.msra.mxu0 %v308
        %328 = vmatprep.subr.bf16.mxu0 0
        %329 = vmatpush1.bf16.msra.mxu0 %v309
        %330 = vmatprep.subr.bf16.mxu0 0
        %331 = vmatpush1.bf16.msra.mxu0 %v310
        %332 = vmatprep.subr.bf16.mxu0 0
        %333 = vmatpush1.bf16.msra.mxu0 %v311
        %334 = vmatprep.subr.bf16.mxu0 0
        %335 = vmatpush1.bf16.msra.mxu0 %v312
        %336 = vmatprep.subr.bf16.mxu0 0
        %337 = vmatpush1.bf16.msra.mxu0 %v313
        %338 = vmatprep.subr.bf16.mxu0 0
        %339 = vmatpush1.bf16.msra.mxu0 0
        %340 = vmatprep.subr.bf16.mxu0 0
        %341 = vmatpush1.bf16.msra.mxu0 0
        %342 = vmatprep.subr.bf16.mxu0 0
        %343 = vmatpush1.bf16.msra.mxu0 0
        %344 = vmatprep.subr.bf16.mxu0 0
        %345 = vmatpush1.bf16.msra.mxu0 0
        %346 = vmatprep.subr.bf16.mxu0 0
        %347 = vmatpush1.bf16.msra.mxu0 0
        %348 = vmatprep.subr.bf16.mxu0 0
        %349 = vmatpush1.bf16.msra.mxu0 0
        %350 = vmatprep.subr.bf16.mxu0 0
        %351 = vmatpush1.bf16.msra.mxu0 0
        %352 = vmatprep.subr.bf16.mxu0 0
        %353 = vmatpush1.bf16.msra.mxu0 0
        %354 = vmatprep.mubr.bf16.mxu0 0
        %355 = vmatmul.mubr.bf16.gmra.mrb[0].mxu0 %v272
        %v356 = vpop.f32.mrb[0].mxu0
        %v357 = vadd.f32 0.0, %v356
        %v358 = vpop.f32.mrb[0].mxu0
        %v359 = vpop.f32.mrb[0].mxu0
        %v360 = vadd.f32 0.0, %v359
        %v361 = vpop.f32.mrb[0].mxu0
        %362 = vdwg.mxu0
        %v363 = vpack.c.bf16 %v360, %v357
        %v365 = vunpack.c.l.b16 %v363
        %v366 = vunpack.c.h.b16 %v363
        %v367 = vpack.c.b16 %v365, %v365
        %v368 = vpack.c.b16 %v366, %v366
        %371 = vst [vmem:[%s234] sm:$0xf] %v367
        %372 = vst [vmem:[%s234 + $0x4] sm:$0xf] %v368
        %v373 = vadd.f32 %v357, %v360
        %v374 = vrot.slane %v373, 4
        %v375 = vadd.f32 %v373, %v374
        %v376 = vrot.slane %v375, 2
        %v377 = vadd.f32 %v375, %v376
        %v378 = vrot.slane %v377, 1
        %v379 = vadd.f32 %v377, %v378
        %380 = vst [vmem:[%s240] sm:$0x1] %v379
        %v381 = vmul.f32 %v357, %v357
        %v382 = vmul.f32 %v360, %v360
        %v383 = vadd.f32 %v381, %v382
        %v384 = vrot.slane %v383, 4
        %v385 = vadd.f32 %v383, %v384
        %v386 = vrot.slane %v385, 2
        %v387 = vadd.f32 %v385, %v386
        %v388 = vrot.slane %v387, 1
        %v389 = vadd.f32 %v387, %v388
        %390 = vst [vmem:[%s246] sm:$0x1] %v389
        %s391 = sand.u32 %s81, 1
        %s392 = scalar_lea.sflag [#allocation4], %s391
        %s393 = sand.u32 %s81, 1
        %s394 = smul.addr %s393, 8
        %s395 = scalar_lea.vmem [#allocation7], %s394
        %s396 = sand.u32 %s26, 1
        %s397 = scalar_lea.sflag [#allocation9], %s396
        %s398 = sand.u32 %s107, 1
        %s399 = scalar_lea.vmem [#allocation8], %s398
        %s400 = sand.u32 %s26, 1
        %s401 = scalar_lea.sflag [#allocation9], %s400
        %s402 = sand.u32 %s133, 1
        %s403 = scalar_lea.vmem [#allocation10], %s402
        // Predicated region
        $region37: #{tpu_custom_call.1} parent=27 // pred_check
          %p404 = pneg %p91
        $region38: #{tpu_custom_call.1} parent=27 // pred_check_branch
          %406 = sbr.rel (%p404) target = $region40
        $region39: #{tpu_custom_call.1} parent=27 // pred_region
          %s407 = smul.u32 2, %s26
          %s409 = ssub.s32 128, 128
          %410 = vsyncadd %s392, %s409
          %s411 = smul.addr %s407, 64
          %s412 = scalar_lea.hbm %s2, %s411
          %s413 = sshll.u32 %s395, 4
          %s414 = int_to_ptr.vmem [resolvable:$true] %s413
          %419 = dma.vmem_to_hbm [thread:$0]  %s414, 128, %s412, %s392, 64, 64, 4
        $region40: #{tpu_custom_call.1} parent=27 // pred_fallthru
          _
        // Predicated region
        $region41: #{tpu_custom_call.1} parent=27 // pred_check
          %p420 = pneg %p117
        $region42: #{tpu_custom_call.1} parent=27 // pred_check_branch
          %422 = sbr.rel (%p420) target = $region44
        $region43: #{tpu_custom_call.1} parent=27 // pred_region
          %s424 = ssub.s32 16, 16
          %425 = vsyncadd %s397, %s424
          %s426 = smul.addr %s26, 16
          %s427 = scalar_lea.hbm %s3, %s426
          %s429 = sshll.u32 %s399, 4
          %s430 = int_to_ptr.vmem [resolvable:$true] %s429
          %432 = dma.vmem_to_hbm [thread:$0]  %s430, 16, %s427, %s397
        $region44: #{tpu_custom_call.1} parent=27 // pred_fallthru
          _
        // Predicated region
        $region45: #{tpu_custom_call.1} parent=27 // pred_check
          %p433 = pneg %p143
        $region46: #{tpu_custom_call.1} parent=27 // pred_check_branch
          %435 = sbr.rel (%p433) target = $region48
        $region47: #{tpu_custom_call.1} parent=27 // pred_region
          %s437 = ssub.s32 16, 16
          %438 = vsyncadd %s401, %s437
          %s439 = smul.addr %s26, 16
          %s440 = scalar_lea.hbm %s4, %s439
          %s442 = sshll.u32 %s403, 4
          %s443 = int_to_ptr.vmem [resolvable:$true] %s442
          %445 = dma.vmem_to_hbm [thread:$0]  %s443, 16, %s440, %s401
        $region48: #{tpu_custom_call.1} parent=27 // pred_fallthru
          _
      $region28: #{tpu_custom_call.1} parent=5 // pred_fallthru
        _
      %p446 = scmp.le.s32.totalorder 2, %s21
      // Predicated region
      $region49: #{tpu_custom_call.1} parent=5 // pred_check
        %p447 = pneg %p446
      $region50: #{tpu_custom_call.1} parent=5 // pred_check_branch
        %449 = sbr.rel (%p447) target = $region52
      $region51: #{tpu_custom_call.1} parent=5 // pred_region
        %s450 = ssub.s32 %s21, 2
        // Predicated region
        $region53: #{tpu_custom_call.1} parent=51 // pred_check
          %p451 = pneg %p97
        $region54: #{tpu_custom_call.1} parent=51 // pred_check_branch
          %453 = sbr.rel (%p451) target = $region56
        $region55: #{tpu_custom_call.1} parent=51 // pred_region
          %s454 = sand.u32 %s82, 1
          %s455 = scalar_lea.sflag [#allocation4], %s454
          %s456 = sand.u32 %s82, 1
          %s457 = smul.addr %s456, 8
          %s458 = scalar_lea.vmem [#allocation7], %s457
          %459 = dma.done %s455, 128
        $region56: #{tpu_custom_call.1} parent=51 // pred_fallthru
          _
        // Predicated region
        $region57: #{tpu_custom_call.1} parent=51 // pred_check
          %p460 = pneg %p123
        $region58: #{tpu_custom_call.1} parent=51 // pred_check_branch
          %462 = sbr.rel (%p460) target = $region60
        $region59: #{tpu_custom_call.1} parent=51 // pred_region
          %s463 = sand.u32 %s27, 1
          %s464 = scalar_lea.sflag [#allocation9], %s463
          %s465 = sand.u32 %s108, 1
          %s466 = scalar_lea.vmem [#allocation8], %s465
          %467 = dma.done %s464, 16
        $region60: #{tpu_custom_call.1} parent=51 // pred_fallthru
          _
        // Predicated region
        $region61: #{tpu_custom_call.1} parent=51 // pred_check
          %p468 = pneg %p149
        $region62: #{tpu_custom_call.1} parent=51 // pred_check_branch
          %470 = sbr.rel (%p468) target = $region64
        $region63: #{tpu_custom_call.1} parent=51 // pred_region
          %s471 = sand.u32 %s27, 1
          %s472 = scalar_lea.sflag [#allocation9], %s471
          %s473 = sand.u32 %s134, 1
          %s474 = scalar_lea.vmem [#allocation10], %s473
          %475 = dma.done %s472, 16
        $region64: #{tpu_custom_call.1} parent=51 // pred_fallthru
          _
      $region52: #{tpu_custom_call.1} parent=5 // pred_fallthru
        _
    $region6: #{tpu_custom_call.1} parent=1 // loop_footer
      %s25 = sadd.s32 1, %s21
    $region7: #{tpu_custom_call.1} parent=1 // loop_footer_branch
      %20 = sbr.rel target = $region3
    $region8: #{tpu_custom_call.1} parent=1 // loop_exit
      _
    %476 = vsyncpa [#allocation3], 1
    %s477 = scalar_lea.sflag [#allocation3], 1
    %478 = vsyncpa %s477, 1
    %479 = vsyncpa [#allocation6], 1
    %480 = vsyncpa [#allocation4], 1
    %s481 = scalar_lea.sflag [#allocation4], 1
    %482 = vsyncpa %s481, 1
    %483 = vsyncpa [#allocation9], 1
    %s484 = scalar_lea.sflag [#allocation9], 1
    %485 = vsyncpa %s484, 1

// kernel: tpu_custom_call.1
$region0: #{tpu_custom_call.1}
  #allocation0 [shape = 'u32[]', space=smem, size = 0x4, offset = 0x4, fixed_abs, tag = 'smem constant byte address 0x4 - core index']
  #allocation1 [shape = 'u32[144,128]{1,0:T(1,128)}', space=vmem, size = 0x12000, scoped, tag = 'internal scratch']
  %s0 = inlined_call_operand.hbm [shape: bf16[48,128], index: 0, kind: input, shape index: {}]
  %s1 = inlined_call_operand.hbm [shape: bf16[128,128], index: 1, kind: input, shape index: {}]
  %s2 = inlined_call_operand.hbm [shape: bf16[48,128], index: 2, kind: output, shape index: {0}]
  %s3 = inlined_call_operand.hbm [shape: f32[3,1,128], index: 3, kind: output, shape index: {1}]
  %s4 = inlined_call_operand.hbm [shape: f32[3,1,128], index: 4, kind: output, shape index: {2}]
  %5 = xla_tuple %s2, %s3, %s4
  %s6 = sld [smem:[#allocation0]]
  $region65: #{tpu_custom_call.1} parent=0
    _
  %s8 = ssub.s32 1, %s6
  %s9 = scalar_select 0, %s8, %s6
  $region1: #{tpu_custom_call.1} parent=0
    #allocation2 [shape = 'u8[8192]{0}', space=vmem, size = 0x2000, scoped, tag = 'input window, operand 0']
    #allocation3 [shape = 's32[2]{0}', space=sflag, size = 0x8, scoped, tag = 'scoped memory for tpu_custom_call.1']
    #allocation4 [shape = 's32[2]{0}', space=sflag, size = 0x8, scoped, tag = 'scoped memory for tpu_custom_call.1']
    #allocation5 [shape = 'u8[32768]{0}', space=vmem, size = 0x8000, scoped, tag = 'input window, operand 1, single buffered']
    #allocation6 [shape = 's32[1]{0}', space=sflag, size = 0x4, scoped, tag = 'scoped memory for tpu_custom_call.1']
    #allocation7 [shape = 'u8[8192]{0}', space=vmem, size = 0x2000, scoped, tag = 'output window, operand 0']
    #allocation8 [shape = 'u8[1024]{0}', space=vmem, size = 0x400, scoped, tag = 'output window, operand 1']
    #allocation9 [shape = 's32[2]{0}', space=sflag, size = 0x8, scoped, tag = 'scoped memory for tpu_custom_call.1']
    #allocation10 [shape = 'u8[1024]{0}', space=vmem, size = 0x400, scoped, tag = 'output window, operand 2']
    %10 = vsyncpa [#allocation3], 0
    %s11 = scalar_lea.sflag [#allocation3], 1
    %12 = vsyncpa %s11, 0
    %13 = vsyncpa [#allocation6], 0
    %14 = vsyncpa [#allocation4], 0
    %s15 = scalar_lea.sflag [#allocation4], 1
    %16 = vsyncpa %s15, 0
    %17 = vsyncpa [#allocation9], 0
    %s18 = scalar_lea.sflag [#allocation9], 1
    %19 = vsyncpa %s18, 0
    loop: start=0, step=1, limit=5
    $region2: #{tpu_custom_call.1} parent=1 // loop_pre_header
      _
    $region3: #{tpu_custom_call.1} parent=1 // loop_header
      %s21 = sphi 0, %s25
      %p22 = scmp.ge.s32.totalorder %s21, 5
      %s31 = sphi 0, %s33
      %s34 = sphi 0, %s31
      %s35 = sphi 0, %s34
      %s51 = sphi 0, %s35
      %s55 = sphi 0, %s55
      %s57 = sphi 0, %s55
      %s58 = sphi 0, %s57
      %s72 = sphi 0, %s58
      %s78 = sphi 0, %s80
      %s81 = sphi 0, %s78
      %s82 = sphi 0, %s81
      %s98 = sphi 0, %s82
      %s104 = sphi 0, %s106
      %s107 = sphi 0, %s104
      %s108 = sphi 0, %s107
      %s124 = sphi 0, %s108
      %s130 = sphi 0, %s132
      %s133 = sphi 0, %s130
      %s134 = sphi 0, %s133
      %s150 = sphi 0, %s134
    $region4: #{tpu_custom_call.1} parent=1 // loop_header_branch
      %24 = sbr.rel (%p22) target = $region8
    $region5: #{tpu_custom_call.1} parent=1 // loop_body
      %s26 = ssub.s32 %s21, 1
      %s27 = ssub.s32 %s21, 2
      %s28 = sadd.s32 %s21, 1
      %s29 = ssub.s32 %s21, %s28
      %p30 = scmp.eq.s32.totalorder %s29, 0
      %s32 = sadd.s32 %s31, 1
      %s33 = scalar_select %p30, %s31, %s32
      %p36 = pneg %p30
      %p37 = scmp.eq.s32.totalorder %s21, 2
      %p38 = por %p36, %p37
      %p39 = scmp.ne.s32.totalorder %s31, %s34
      %p40 = scmp.eq.s32.totalorder %s21, 0
      %p41 = por %p39, %p40
      %p42 = scmp.ne.s32.totalorder %s31, %s34
      %p43 = scmp.eq.s32.totalorder %s26, 2
      %p44 = por %p42, %p43
      %p45 = scmp.ne.s32.totalorder %s34, %s35
      %p46 = scmp.eq.s32.totalorder %s26, 0
      %p47 = por %p45, %p46
      %p48 = scmp.ne.s32.totalorder %s34, %s35
      %p49 = scmp.eq.s32.totalorder %s27, 2
      %p50 = por %p48, %p49
      %p52 = scmp.ne.s32.totalorder %s35, %s51
      %p53 = scmp.eq.s32.totalorder %s27, 0
      %p54 = por %p52, %p53
      %s56 = sadd.s32 %s55, 1
      %p59 = scmp.eq.s32.totalorder %s21, 2
      %p60 = scmp.ne.s32.totalorder %s55, %s57
      %p61 = scmp.eq.s32.totalorder %s21, 0
      %p62 = por %p60, %p61
      %p63 = scmp.ne.s32.totalorder %s55, %s57
      %p64 = scmp.eq.s32.totalorder %s26, 2
      %p65 = por %p63, %p64
      %p66 = scmp.ne.s32.totalorder %s57, %s58
      %p67 = scmp.eq.s32.totalorder %s26, 0
      %p68 = por %p66, %p67
      %p69 = scmp.ne.s32.totalorder %s57, %s58
      %p70 = scmp.eq.s32.totalorder %s27, 2
      %p71 = por %p69, %p70
      %p73 = scmp.ne.s32.totalorder %s58, %s72
      %p74 = scmp.eq.s32.totalorder %s27, 0
      %p75 = por %p73, %p74
      %s76 = ssub.s32 %s21, %s28
      %p77 = scmp.eq.s32.totalorder %s76, 0
      %s79 = sadd.s32 %s78, 1
      %s80 = scalar_select %p77, %s78, %s79
      %p83 = pneg %p77
      %p84 = scmp.eq.s32.totalorder %s21, 2
      %p85 = por %p83, %p84
      %p86 = scmp.ne.s32.totalorder %s78, %s81
      %p87 = scmp.eq.s32.totalorder %s21, 0
      %p88 = por %p86, %p87
      %p89 = scmp.ne.s32.totalorder %s78, %s81
      %p90 = scmp.eq.s32.totalorder %s26, 2
      %p91 = por %p89, %p90
      %p92 = scmp.ne.s32.totalorder %s81, %s82
      %p93 = scmp.eq.s32.totalorder %s26, 0
      %p94 = por %p92, %p93
      %p95 = scmp.ne.s32.totalorder %s81, %s82
      %p96 = scmp.eq.s32.totalorder %s27, 2
      %p97 = por %p95, %p96
      %p99 = scmp.ne.s32.totalorder %s82, %s98
      %p100 = scmp.eq.s32.totalorder %s27, 0
      %p101 = por %p99, %p100
      %s102 = ssub.s32 %s21, %s28
      %p103 = scmp.eq.s32.totalorder %s102, 0
      %s105 = sadd.s32 %s104, 1
      %s106 = scalar_select %p103, %s104, %s105
      %p109 = pneg %p103
      %p110 = scmp.eq.s32.totalorder %s21, 2
      %p111 = por %p109, %p110
      %p112 = scmp.ne.s32.totalorder %s104, %s107
      %p113 = scmp.eq.s32.totalorder %s21, 0
      %p114 = por %p112, %p113
      %p115 = scmp.ne.s32.totalorder %s104, %s107
      %p116 = scmp.eq.s32.totalorder %s26, 2
      %p117 = por %p115, %p116
      %p118 = scmp.ne.s32.totalorder %s107, %s108
      %p119 = scmp.eq.s32.totalorder %s26, 0
      %p120 = por %p118, %p119
      %p121 = scmp.ne.s32.totalorder %s107, %s108
      %p122 = scmp.eq.s32.totalorder %s27, 2
      %p123 = por %p121, %p122
      %p125 = scmp.ne.s32.totalorder %s108, %s124
      %p126 = scmp.eq.s32.totalorder %s27, 0
      %p127 = por %p125, %p126
      %s128 = ssub.s32 %s21, %s28
      %p129 = scmp.eq.s32.totalorder %s128, 0
      %s131 = sadd.s32 %s130, 1
      %s132 = scalar_select %p129, %s130, %s131
      %p135 = pneg %p129
      %p136 = scmp.eq.s32.totalorder %s21, 2
      %p137 = por %p135, %p136
      %p138 = scmp.ne.s32.totalorder %s130, %s133
      %p139 = scmp.eq.s32.totalorder %s21, 0
      %p140 = por %p138, %p139
      %p141 = scmp.ne.s32.totalorder %s130, %s133
      %p142 = scmp.eq.s32.totalorder %s26, 2
      %p143 = por %p141, %p142
      %p144 = scmp.ne.s32.totalorder %s133, %s134
      %p145 = scmp.eq.s32.totalorder %s26, 0
      %p146 = por %p144, %p145
      %p147 = scmp.ne.s32.totalorder %s133, %s134
      %p148 = scmp.eq.s32.totalorder %s27, 2
      %p149 = por %p147, %p148
      %p151 = scmp.ne.s32.totalorder %s134, %s150
      %p152 = scmp.eq.s32.totalorder %s27, 0
      %p153 = por %p151, %p152
      %p154 = scmp.le.s32.totalorder 1, %s21
      %p155 = scmp.lt.s32.totalorder %s21, 4
      %p156 = pnand %p154, %p155
      %p157 = pneg %p156
      // Predicated region
      $region9: #{tpu_custom_call.1} parent=5 // pred_check
        _
      $region10: #{tpu_custom_call.1} parent=5 // pred_check_branch
        %159 = sbr.rel (%p156) target = $region12
      $region11: #{tpu_custom_call.1} parent=5 // pred_region
        %s160 = ssub.s32 %s21, 1
        // Predicated region
        $region13: #{tpu_custom_call.1} parent=11 // pred_check
          %p161 = pneg %p68
        $region14: #{tpu_custom_call.1} parent=11 // pred_check_branch
          %163 = sbr.rel (%p161) target = $region16
        $region15: #{tpu_custom_call.1} parent=11 // pred_region
          %s165 = ssub.s32 1024, 1024
          %166 = vsyncadd [#allocation6], %s165
          %s167 = sshll.u32 [#allocation5], 4
          %s168 = int_to_ptr.vmem [resolvable:$true] %s167
          %173 = dma.hbm_to_vmem [thread:$0]  %s1, 1024, %s168, [#allocation6], 64, 64, 4
        $region16: #{tpu_custom_call.1} parent=11 // pred_fallthru
          _
      $region12: #{tpu_custom_call.1} parent=5 // pred_fallthru
        _
      %p174 = scmp.lt.s32.totalorder %s21, 3
      // Predicated region
      $region17: #{tpu_custom_call.1} parent=5 // pred_check
        %p175 = pneg %p174
      $region18: #{tpu_custom_call.1} parent=5 // pred_check_branch
        %177 = sbr.rel (%p175) target = $region20
      $region19: #{tpu_custom_call.1} parent=5 // pred_region
        // Predicated region
        $region21: #{tpu_custom_call.1} parent=19 // pred_check
          %p178 = pneg %p41
        $region22: #{tpu_custom_call.1} parent=19 // pred_check_branch
          %180 = sbr.rel (%p178) target = $region24
        $region23: #{tpu_custom_call.1} parent=19 // pred_region
          %s181 = sand.u32 %s31, 1
          %s182 = scalar_lea.sflag [#allocation3], %s181
          %s183 = sand.u32 %s31, 1
          %s184 = smul.addr %s183, 8
          %s185 = scalar_lea.vmem [#allocation2], %s184
          %s186 = smul.u32 2, %s21
          %s188 = ssub.s32 128, 128
          %189 = vsyncadd %s182, %s188
          %s190 = smul.addr %s186, 64
          %s191 = scalar_lea.hbm %s0, %s190
          %s192 = sshll.u32 %s185, 4
          %s193 = int_to_ptr.vmem [resolvable:$true] %s192
          %198 = dma.hbm_to_vmem [thread:$0]  %s191, 128, %s193, %s182, 64, 64, 4
        $region24: #{tpu_custom_call.1} parent=19 // pred_fallthru
          _
      $region20: #{tpu_custom_call.1} parent=5 // pred_fallthru
        _
      %p199 = scmp.le.s32.totalorder 1, %s21
      %p200 = scmp.lt.s32.totalorder %s21, 4
      %p201 = pnand %p199, %p200
      %p202 = pneg %p201
      // Predicated region
      $region25: #{tpu_custom_call.1} parent=5 // pred_check
        _
      $region26: #{tpu_custom_call.1} parent=5 // pred_check_branch
        %204 = sbr.rel (%p201) target = $region28
      $region27: #{tpu_custom_call.1} parent=5 // pred_region
        %s205 = ssub.s32 %s21, 1
        %s206 = sand.u32 %s34, 1
        %s207 = scalar_lea.sflag [#allocation3], %s206
        %s208 = sand.u32 %s34, 1
        %s209 = smul.addr %s208, 8
        %s210 = scalar_lea.vmem [#allocation2], %s209
        // Predicated region
        $region29: #{tpu_custom_call.1} parent=27 // pred_check
          %p211 = pneg %p47
        $region30: #{tpu_custom_call.1} parent=27 // pred_check_branch
          %213 = sbr.rel (%p211) target = $region32
        $region31: #{tpu_custom_call.1} parent=27 // pred_region
          %214 = dma.done %s207, 128
        $region32: #{tpu_custom_call.1} parent=27 // pred_fallthru
          _
        // Predicated region
        $region33: #{tpu_custom_call.1} parent=27 // pred_check
          %p215 = pneg %p68
        $region34: #{tpu_custom_call.1} parent=27 // pred_check_branch
          %217 = sbr.rel (%p215) target = $region36
        $region35: #{tpu_custom_call.1} parent=27 // pred_region
          %218 = dma.done [#allocation6], 1024
        $region36: #{tpu_custom_call.1} parent=27 // pred_fallthru
          _
        %s219 = sand.u32 %s34, 1
        %s220 = scalar_lea.sflag [#allocation3], %s219
        %s221 = sand.u32 %s34, 1
        %s222 = smul.addr %s221, 8
        %s223 = scalar_lea.vmem [#allocation2], %s222
        %p224 = pneg %p47
        %p225 = pneg %p44
        %p226 = pneg %p68
        %p227 = pneg %p65
        %p228 = pneg %p94
        %p229 = pneg %p91
        %s230 = sand.u32 %s81, 1
        %s231 = scalar_lea.sflag [#allocation4], %s230
        %s232 = sand.u32 %s81, 1
        %s233 = smul.addr %s232, 8
        %s234 = scalar_lea.vmem [#allocation7], %s233
        %p235 = pneg %p120
        %p236 = pneg %p117
        %s237 = sand.u32 %s26, 1
        %s238 = scalar_lea.sflag [#allocation9], %s237
        %s239 = sand.u32 %s107, 1
        %s240 = scalar_lea.vmem [#allocation8], %s239
        %p241 = pneg %p146
        %p242 = pneg %p143
        %s243 = sand.u32 %s26, 1
        %s244 = scalar_lea.sflag [#allocation9], %s243
        %s245 = sand.u32 %s133, 1
        %s246 = scalar_lea.vmem [#allocation10], %s245
        %s247 = smul.u32 2, %s26
        %s248 = smul.u32 2, %s26
        %v250 = vld [vmem:[%s210] sm:$0xf]
        %v251 = vld [vmem:[%s210 + $0x4] sm:$0xf]
        %v252 = vld [vmem:[#allocation5] sm:$0xf]
        %v253 = vld [vmem:[#allocation5 + $0x4] sm:$0xf]
        %v254 = vld [vmem:[#allocation5 + $0x8] sm:$0xf]
        %v255 = vld [vmem:[#allocation5 + $0xc] sm:$0xf]
        %v256 = vld [vmem:[#allocation5 + $0x10] sm:$0xf]
        %v257 = vld [vmem:[#allocation5 + $0x14] sm:$0xf]
        %v258 = vld [vmem:[#allocation5 + $0x18] sm:$0xf]
        %v259 = vld [vmem:[#allocation5 + $0x1c] sm:$0xf]
        %v260 = vld [vmem:[#allocation5 + $0x20] sm:$0xf]
        %v261 = vld [vmem:[#allocation5 + $0x24] sm:$0xf]
        %v262 = vld [vmem:[#allocation5 + $0x28] sm:$0xf]
        %v263 = vld [vmem:[#allocation5 + $0x2c] sm:$0xf]
        %v264 = vld [vmem:[#allocation5 + $0x30] sm:$0xf]
        %v265 = vld [vmem:[#allocation5 + $0x34] sm:$0xf]
        %v266 = vld [vmem:[#allocation5 + $0x38] sm:$0xf]
        %v267 = vld [vmem:[#allocation5 + $0x3c] sm:$0xf]
        %v270 = vunpack.c.l.b16 %v250
        %v271 = vunpack.c.l.b16 %v251
        %v272 = vpack.c.b16 %v271, %v270
        %v290 = vunpack.c.l.b16 %v252
        %v291 = vunpack.c.l.b16 %v253
        %v292 = vunpack.c.l.b16 %v254
        %v293 = vunpack.c.l.b16 %v255
        %v294 = vunpack.c.l.b16 %v256
        %v295 = vunpack.c.l.b16 %v257
        %v296 = vunpack.c.l.b16 %v258
        %v297 = vunpack.c.l.b16 %v259
        %v298 = vunpack.c.l.b16 %v260
        %v299 = vunpack.c.l.b16 %v261
        %v300 = vunpack.c.l.b16 %v262
        %v301 = vunpack.c.l.b16 %v263
        %v302 = vunpack.c.l.b16 %v264
        %v303 = vunpack.c.l.b16 %v265
        %v304 = vunpack.c.l.b16 %v266
        %v305 = vunpack.c.l.b16 %v267
        %v306 = vpack.c.b16 %v291, %v290
        %v307 = vpack.c.b16 %v293, %v292
        %v308 = vpack.c.b16 %v295, %v294
        %v309 = vpack.c.b16 %v297, %v296
        %v310 = vpack.c.b16 %v299, %v298
        %v311 = vpack.c.b16 %v301, %v300
        %v312 = vpack.c.b16 %v303, %v302
        %v313 = vpack.c.b16 %v305, %v304
        %322 = vmatprep.subr.bf16.mxu0 0
        %323 = vmatpush1.bf16.msra.mxu0 %v306
        %324 = vmatprep.subr.bf16.mxu0 0
        %325 = vmatpush1.bf16.msra.mxu0 %v307
        %326 = vmatprep.subr.bf16.mxu0 0
        %327 = vmatpush1.bf16.msra.mxu0 %v308
        %328 = vmatprep.subr.bf16.mxu0 0
        %329 = vmatpush1.bf16.msra.mxu0 %v309
        %330 = vmatprep.subr.bf16.mxu0 0
        %331 = vmatpush1.bf16.msra.mxu0 %v310
        %332 = vmatprep.subr.bf16.mxu0 0
        %333 = vmatpush1.bf16.msra.mxu0 %v311
        %334 = vmatprep.subr.bf16.mxu0 0
        %335 = vmatpush1.bf16.msra.mxu0 %v312
        %336 = vmatprep.subr.bf16.mxu0 0
        %337 = vmatpush1.bf16.msra.mxu0 %v313
        %338 = vmatprep.subr.bf16.mxu0 0
        %339 = vmatpush1.bf16.msra.mxu0 0
        %340 = vmatprep.subr.bf16.mxu0 0
        %341 = vmatpush1.bf16.msra.mxu0 0
        %342 = vmatprep.subr.bf16.mxu0 0
        %343 = vmatpush1.bf16.msra.mxu0 0
        %344 = vmatprep.subr.bf16.mxu0 0
        %345 = vmatpush1.bf16.msra.mxu0 0
        %346 = vmatprep.subr.bf16.mxu0 0
        %347 = vmatpush1.bf16.msra.mxu0 0
        %348 = vmatprep.subr.bf16.mxu0 0
        %349 = vmatpush1.bf16.msra.mxu0 0
        %350 = vmatprep.subr.bf16.mxu0 0
        %351 = vmatpush1.bf16.msra.mxu0 0
        %352 = vmatprep.subr.bf16.mxu0 0
        %353 = vmatpush1.bf16.msra.mxu0 0
        %354 = vmatprep.mubr.bf16.mxu0 0
        %355 = vmatmul.mubr.bf16.gmra.mrb[0].mxu0 %v272
        %v356 = vpop.f32.mrb[0].mxu0
        %v357 = vadd.f32 0.0, %v356
        %v358 = vpop.f32.mrb[0].mxu0
        %v359 = vpop.f32.mrb[0].mxu0
        %v360 = vadd.f32 0.0, %v359
        %v361 = vpop.f32.mrb[0].mxu0
        %362 = vdwg.mxu0
        %v363 = vpack.c.bf16 %v360, %v357
        %v365 = vunpack.c.l.b16 %v363
        %v366 = vunpack.c.h.b16 %v363
        %v367 = vpack.c.b16 %v365, %v365
        %v368 = vpack.c.b16 %v366, %v366
        %371 = vst [vmem:[%s234] sm:$0xf] %v367
        %372 = vst [vmem:[%s234 + $0x4] sm:$0xf] %v368
        %v373 = vadd.f32 %v357, %v360
        %v374 = vrot.slane %v373, 4
        %v375 = vadd.f32 %v373, %v374
        %v376 = vrot.slane %v375, 2
        %v377 = vadd.f32 %v375, %v376
        %v378 = vrot.slane %v377, 1
        %v379 = vadd.f32 %v377, %v378
        %380 = vst [vmem:[%s240] sm:$0x1] %v379
        %v381 = vmul.f32 %v357, %v357
        %v382 = vmul.f32 %v360, %v360
        %v383 = vadd.f32 %v381, %v382
        %v384 = vrot.slane %v383, 4
        %v385 = vadd.f32 %v383, %v384
        %v386 = vrot.slane %v385, 2
        %v387 = vadd.f32 %v385, %v386
        %v388 = vrot.slane %v387, 1
        %v389 = vadd.f32 %v387, %v388
        %390 = vst [vmem:[%s246] sm:$0x1] %v389
        %s391 = sand.u32 %s81, 1
        %s392 = scalar_lea.sflag [#allocation4], %s391
        %s393 = sand.u32 %s81, 1
        %s394 = smul.addr %s393, 8
        %s395 = scalar_lea.vmem [#allocation7], %s394
        %s396 = sand.u32 %s26, 1
        %s397 = scalar_lea.sflag [#allocation9], %s396
        %s398 = sand.u32 %s107, 1
        %s399 = scalar_lea.vmem [#allocation8], %s398
        %s400 = sand.u32 %s26, 1
        %s401 = scalar_lea.sflag [#allocation9], %s400
        %s402 = sand.u32 %s133, 1
        %s403 = scalar_lea.vmem [#allocation10], %s402
        // Predicated region
        $region37: #{tpu_custom_call.1} parent=27 // pred_check
          %p404 = pneg %p91
        $region38: #{tpu_custom_call.1} parent=27 // pred_check_branch
          %406 = sbr.rel (%p404) target = $region40
        $region39: #{tpu_custom_call.1} parent=27 // pred_region
          %s407 = smul.u32 2, %s26
          %s409 = ssub.s32 128, 128
          %410 = vsyncadd %s392, %s409
          %s411 = smul.addr %s407, 64
          %s412 = scalar_lea.hbm %s2, %s411
          %s413 = sshll.u32 %s395, 4
          %s414 = int_to_ptr.vmem [resolvable:$true] %s413
          %419 = dma.vmem_to_hbm [thread:$0]  %s414, 128, %s412, %s392, 64, 64, 4
        $region40: #{tpu_custom_call.1} parent=27 // pred_fallthru
          _
        // Predicated region
        $region41: #{tpu_custom_call.1} parent=27 // pred_check
          %p420 = pneg %p117
        $region42: #{tpu_custom_call.1} parent=27 // pred_check_branch
          %422 = sbr.rel (%p420) target = $region44
        $region43: #{tpu_custom_call.1} parent=27 // pred_region
          %s424 = ssub.s32 16, 16
          %425 = vsyncadd %s397, %s424
          %s426 = smul.addr %s26, 16
          %s427 = scalar_lea.hbm %s3, %s426
          %s429 = sshll.u32 %s399, 4
          %s430 = int_to_ptr.vmem [resolvable:$true] %s429
          %432 = dma.vmem_to_hbm [thread:$0]  %s430, 16, %s427, %s397
        $region44: #{tpu_custom_call.1} parent=27 // pred_fallthru
          _
        // Predicated region
        $region45: #{tpu_custom_call.1} parent=27 // pred_check
          %p433 = pneg %p143
        $region46: #{tpu_custom_call.1} parent=27 // pred_check_branch
          %435 = sbr.rel (%p433) target = $region48
        $region47: #{tpu_custom_call.1} parent=27 // pred_region
          %s437 = ssub.s32 16, 16
          %438 = vsyncadd %s401, %s437
          %s439 = smul.addr %s26, 16
          %s440 = scalar_lea.hbm %s4, %s439
          %s442 = sshll.u32 %s403, 4
          %s443 = int_to_ptr.vmem [resolvable:$true] %s442
          %445 = dma.vmem_to_hbm [thread:$0]  %s443, 16, %s440, %s401
        $region48: #{tpu_custom_call.1} parent=27 // pred_fallthru
          _
      $region28: #{tpu_custom_call.1} parent=5 // pred_fallthru
        _
      %p446 = scmp.le.s32.totalorder 2, %s21
      // Predicated region
      $region49: #{tpu_custom_call.1} parent=5 // pred_check
        %p447 = pneg %p446
      $region50: #{tpu_custom_call.1} parent=5 // pred_check_branch
        %449 = sbr.rel (%p447) target = $region52
      $region51: #{tpu_custom_call.1} parent=5 // pred_region
        %s450 = ssub.s32 %s21, 2
        // Predicated region
        $region53: #{tpu_custom_call.1} parent=51 // pred_check
          %p451 = pneg %p97
        $region54: #{tpu_custom_call.1} parent=51 // pred_check_branch
          %453 = sbr.rel (%p451) target = $region56
        $region55: #{tpu_custom_call.1} parent=51 // pred_region
          %s454 = sand.u32 %s82, 1
          %s455 = scalar_lea.sflag [#allocation4], %s454
          %s456 = sand.u32 %s82, 1
          %s457 = smul.addr %s456, 8
          %s458 = scalar_lea.vmem [#allocation7], %s457
          %459 = dma.done %s455, 128
        $region56: #{tpu_custom_call.1} parent=51 // pred_fallthru
          _
        // Predicated region
        $region57: #{tpu_custom_call.1} parent=51 // pred_check
          %p460 = pneg %p123
        $region58: #{tpu_custom_call.1} parent=51 // pred_check_branch
          %462 = sbr.rel (%p460) target = $region60
        $region59: #{tpu_custom_call.1} parent=51 // pred_region
          %s463 = sand.u32 %s27, 1
          %s464 = scalar_lea.sflag [#allocation9], %s463
          %s465 = sand.u32 %s108, 1
          %s466 = scalar_lea.vmem [#allocation8], %s465
          %467 = dma.done %s464, 16
        $region60: #{tpu_custom_call.1} parent=51 // pred_fallthru
          _
        // Predicated region
        $region61: #{tpu_custom_call.1} parent=51 // pred_check
          %p468 = pneg %p149
        $region62: #{tpu_custom_call.1} parent=51 // pred_check_branch
          %470 = sbr.rel (%p468) target = $region64
        $region63: #{tpu_custom_call.1} parent=51 // pred_region
          %s471 = sand.u32 %s27, 1
          %s472 = scalar_lea.sflag [#allocation9], %s471
          %s473 = sand.u32 %s134, 1
          %s474 = scalar_lea.vmem [#allocation10], %s473
          %475 = dma.done %s472, 16
        $region64: #{tpu_custom_call.1} parent=51 // pred_fallthru
          _
      $region52: #{tpu_custom_call.1} parent=5 // pred_fallthru
        _
    $region6: #{tpu_custom_call.1} parent=1 // loop_footer
      %s25 = sadd.s32 1, %s21
    $region7: #{tpu_custom_call.1} parent=1 // loop_footer_branch
      %20 = sbr.rel target = $region3
    $region8: #{tpu_custom_call.1} parent=1 // loop_exit
      _
    %476 = vsyncpa [#allocation3], 1
    %s477 = scalar_lea.sflag [#allocation3], 1
    %478 = vsyncpa %s477, 1
    %479 = vsyncpa [#allocation6], 1
    %480 = vsyncpa [#allocation4], 1
    %s481 = scalar_lea.sflag [#allocation4], 1
    %482 = vsyncpa %s481, 1
    %483 = vsyncpa [#allocation9], 1
    %s484 = scalar_lea.sflag [#allocation9], 1
    %485 = vsyncpa %s484, 1

</llo_original>
